<compile_context>
chip_gen: v7x
topology: tpu7x:2x2x1
jax: 0.10.0
libtpu: 0.0.40
codegen_flags: <defaults>
</compile_context>

<pallas_src>
import functools
import math

import jax
import jax.numpy as jnp
from jax.experimental import pallas as pl
from jax.experimental.pallas import tpu as pltpu

# Large finite negative used for masking: behaves like -inf in f32 softmax
# (exp underflows to exactly 0) but cannot produce NaN for fully-masked rows.
_MASK_VALUE = -1e30


def _pick_tile(dim, target, align):
    """Largest tile <= target that divides `dim` and is a multiple of `align`,
    falling back to the full dim (satisfies the (8,128) block rule)."""
    if dim <= target:
        return dim
    t = (target // align) * align
    while t >= align:
        if dim % t == 0:
            return t
        t -= align
    return dim


# ----------------------------- tiled linear ------------------------------- #
def _linear_kernel(x_ref, w_ref, b_ref, o_ref, acc_ref):
    k = pl.program_id(2)

    @pl.when(k == 0)
    def _():
        acc_ref[...] = jnp.zeros_like(acc_ref)

    acc_ref[...] += jnp.dot(
        x_ref[...], w_ref[...], preferred_element_type=jnp.float32
    )

    @pl.when(k == pl.num_programs(2) - 1)
    def _():
        o_ref[...] = (acc_ref[...] + b_ref[...].astype(jnp.float32)).astype(
            o_ref.dtype
        )


def linear(x, w, b, *, out_dtype):
    """y = x @ w + b with x:(M,K), w:(K,F), b:(1,F). MXU-tiled, f32 accumulation."""
    M, K = x.shape
    F = w.shape[1]
    isz = jnp.dtype(x.dtype).itemsize
    # Align the sublane tile to the packed-sublane height of the compute dtype
    # (8 rows for f32, 16 for bf16, 32 for int8/fp8).
    align_m = {4: 8, 2: 16, 1: 32}.get(isz, 8)
    # 512-class tiles: ~85% of HBM roofline on v5e/v6e; the double-buffered
    # footprint (2 inputs + output, bf16, + f32 accumulator) is ~6 MiB, which
    # also fits comfortably inside v7x's 64 MiB VMEM.
    tm = _pick_tile(M, 512, align_m)     # sublane axis
    tn = _pick_tile(F, 512, 128)         # lane axis (lane-dense output stores)
    tk = _pick_tile(K, 512, 128)         # contraction axis
    grid = (M // tm, F // tn, K // tk)
    cost = pl.CostEstimate(
        flops=2 * M * K * F,
        transcendentals=0,
        bytes_accessed=(M * K + K * F) * isz
        + F * 4
        + M * F * jnp.dtype(out_dtype).itemsize,
    )
    return pl.pallas_call(
        _linear_kernel,
        out_shape=jax.ShapeDtypeStruct((M, F), out_dtype),
        grid=grid,
        in_specs=[
            pl.BlockSpec((tm, tk), lambda i, j, k: (i, k)),
            pl.BlockSpec((tk, tn), lambda i, j, k: (k, j)),
            pl.BlockSpec((1, tn), lambda i, j, k: (0, j)),
        ],
        out_specs=pl.BlockSpec((tm, tn), lambda i, j, k: (i, j)),
        scratch_shapes=[pltpu.VMEM((tm, tn), jnp.float32)],
        compiler_params=pltpu.CompilerParams(
            dimension_semantics=("parallel", "parallel", "arbitrary"),
            vmem_limit_bytes=48 * 1024 * 1024,
        ),
        cost_estimate=cost,
    )(x, w, b)


# ----------------- flash attention fused with output dense ----------------- #
def _flash_dense_kernel(q_ref, k_ref, v_ref, wd_ref, bd_ref, y_ref,
                        m_sc, l_sc, acc_sc, yacc_sc, *,
                        tq, tkv, head_dim, scale, causal, approx_recip):
    # grid = (B, Sq/tq, H, Skv/tkv); kv innermost, head axis is a reduction
    # for the fused output projection.
    qi = pl.program_id(1)
    h = pl.program_id(2)
    ki = pl.program_id(3)
    nh = pl.num_programs(2)
    nk = pl.num_programs(3)

    @pl.when(ki == 0)
    def _():
        m_sc[...] = jnp.full_like(m_sc, _MASK_VALUE)
        l_sc[...] = jnp.zeros_like(l_sc)
        acc_sc[...] = jnp.zeros_like(acc_sc)

    @pl.when(jnp.logical_and(ki == 0, h == 0))
    def _():
        yacc_sc[...] = jnp.zeros_like(yacc_sc)

    def compute_block():
        q = q_ref[0, 0]            # (tq,  Dh)
        k = k_ref[0, 0]            # (tkv, Dh)
        v = v_ref[0, 0]            # (tkv, Dh)
        # scores = q @ k^T, f32 accumulation; scale applied to the f32 scores
        # (matches torch softmax(weight / sqrt(head_dim))).
        s = jax.lax.dot_general(
            q, k, (((1,), (1,)), ((), ())), preferred_element_type=jnp.float32
        ) * scale
        if causal:
            row = qi * tq + jax.lax.broadcasted_iota(jnp.int32, (tq, tkv), 0)
            col = ki * tkv + jax.lax.broadcasted_iota(jnp.int32, (tq, tkv), 1)
            s = jnp.where(col > row, _MASK_VALUE, s)
        # online softmax update (all f32)
        m_prev = m_sc[...]
        m_new = jnp.maximum(m_prev, jnp.max(s, axis=-1, keepdims=True))
        alpha = jnp.exp(m_prev - m_new)
        p = jnp.exp(s - m_new)
        l_sc[...] = alpha * l_sc[...] + jnp.sum(p, axis=-1, keepdims=True)
        acc_sc[...] = alpha * acc_sc[...] + jnp.dot(
            p.astype(v.dtype), v, preferred_element_type=jnp.float32
        )
        m_sc[...] = m_new

    if causal:
        # Skip kv blocks strictly above the diagonal (their DMAs are also
        # clamped away in the index_map).
        @pl.when(ki * tkv <= qi * tq + (tq - 1))
        def _():
            compute_block()
    else:
        compute_block()

    # Per-head finalize: normalize and fold this head's slice of the output
    # projection into the fused (tq, E) accumulator.
    @pl.when(ki == nk - 1)
    def _():
        o_h = acc_sc[...] * pl.reciprocal(l_sc[...], approx=approx_recip)
        start = pl.multiple_of(h * head_dim, head_dim)
        w_h = wd_ref[pl.ds(start, head_dim), :]          # (Dh, E) VMEM slice
        yacc_sc[...] += jnp.dot(
            o_h.astype(w_h.dtype), w_h, preferred_element_type=jnp.float32
        )

    # Final lane-dense store once all heads contributed.
    @pl.when(jnp.logical_and(ki == nk - 1, h == nh - 1))
    def _():
        y_ref[0] = (yacc_sc[...] + bd_ref[...].astype(jnp.float32)).astype(
            y_ref.dtype
        )


def flash_attention_dense(q, k, v, w_dense, b_dense, *, scale, causal,
                          out_dtype, approx_recip):
    """Flash attention over head-major q/k/v (B,H,S,Dh) with the output
    projection fused in; returns (B, S, E)."""
    B, H, S, Dh = q.shape
    E = w_dense.shape[1]
    # 256-class q/kv tiles keep the per-step footprint small enough for v7x's
    # 64 MiB VMEM even at long sequence lengths.
    tq = _pick_tile(S, 256, 8)
    tkv = _pick_tile(S, 256, 8)
    grid = (B, S // tq, H, S // tkv)

    def q_map(b, qi, h, ki):
        return (b, h, qi, 0)

    def kv_map(b, qi, h, ki):
        if causal:
            # Clamp the kv block index for fully-masked (skipped) steps so the
            # pipeline does not re-issue DMAs for data that is never read.
            last = (qi * tq + (tq - 1)) // tkv
            ki = jnp.minimum(ki, last)
        return (b, h, ki, 0)

    kernel = functools.partial(
        _flash_dense_kernel,
        tq=tq, tkv=tkv, head_dim=Dh, scale=scale, causal=causal,
        approx_recip=approx_recip,
    )

    isz = jnp.dtype(q.dtype).itemsize
    cost = pl.CostEstimate(
        flops=4 * B * H * S * S * Dh + 2 * B * S * E * E,
        transcendentals=B * H * S * S,
        bytes_accessed=(3 * B * H * S * Dh + (H * Dh) * E) * isz
        + E * 4
        + B * S * E * jnp.dtype(out_dtype).itemsize,
    )

    return pl.pallas_call(
        kernel,
        out_shape=jax.ShapeDtypeStruct((B, S, E), out_dtype),
        grid=grid,
        in_specs=[
            pl.BlockSpec((1, 1, tq, Dh), q_map),
            pl.BlockSpec((1, 1, tkv, Dh), kv_map),
            pl.BlockSpec((1, 1, tkv, Dh), kv_map),
            # Dense weight stays resident in VMEM (constant block index).
            pl.BlockSpec((H * Dh, E), lambda b, qi, h, ki: (0, 0)),
            pl.BlockSpec((1, E), lambda b, qi, h, ki: (0, 0)),
        ],
        out_specs=pl.BlockSpec((1, tq, E), lambda b, qi, h, ki: (b, qi, 0)),
        scratch_shapes=[
            pltpu.VMEM((tq, 1), jnp.float32),    # m
            pltpu.VMEM((tq, 1), jnp.float32),    # l
            pltpu.VMEM((tq, Dh), jnp.float32),   # per-head acc
            pltpu.VMEM((tq, E), jnp.float32),    # fused dense accumulator
        ],
        compiler_params=pltpu.CompilerParams(
            dimension_semantics=("parallel", "parallel", "arbitrary", "arbitrary"),
            vmem_limit_bytes=48 * 1024 * 1024,
        ),
        cost_estimate=cost,
    )(q, k, v, w_dense, b_dense)


# ------------------------------ module glue -------------------------------- #
def init_params(key, heads, embed_dim):
    """Deterministic synthetic params matching nn.Linear shapes.

    qkv:   nn.Linear(embed_dim, 3*embed_dim, bias=True)
    dense: nn.Linear(embed_dim, embed_dim,   bias=True)
    Weights are stored as (in, out) so kernels compute x @ W + b.
    """
    k1, k2, k3, k4 = jax.random.split(key, 4)
    bound = 1.0 / math.sqrt(embed_dim)
    u = lambda k, shape: jax.random.uniform(k, shape, jnp.float32, -bound, bound)
    return dict(
        w_qkv=u(k1, (embed_dim, 3 * embed_dim)),
        b_qkv=u(k2, (1, 3 * embed_dim)),
        w_dense=u(k3, (embed_dim, embed_dim)),
        b_dense=u(k4, (1, embed_dim)),
    )


def self_attention(x, params, *, heads, mask, compute_dtype=jnp.bfloat16):
    """Pallas forward: x (B, S, E) -> (B, S, E).

    compute_dtype controls the MXU operand dtype (bf16 = fast path); scores,
    softmax, and all matmul accumulation stay in f32.
    """
    B, S, E = x.shape
    Dh = E // heads
    assert Dh * heads == E, "Embed size needs to div by heads"
    cd = compute_dtype
    approx = cd != jnp.float32

    xf = x.reshape(B * S, E).astype(cd)
    qkv = linear(xf, params["w_qkv"].astype(cd), params["b_qkv"], out_dtype=cd)

    # One XLA layout transform to head-major (3, B, H, S, Dh) so the flash
    # kernel gets independently tileable, aligned q/k/v blocks per head.
    qkv = qkv.reshape(B, S, 3, heads, Dh).transpose(2, 0, 3, 1, 4)
    q, k, v = qkv[0], qkv[1], qkv[2]

    # Attention + output projection fused into a single pallas_call.
    y = flash_attention_dense(
        q, k, v,
        params["w_dense"].astype(cd), params["b_dense"],
        scale=1.0 / math.sqrt(Dh),
        causal=bool(mask),
        out_dtype=jnp.float32,
        approx_recip=approx,
    )
    return y


def self_attention_ref(x, params, *, heads, mask):
    """Pure-JAX f32 reference mirroring the torch forward."""
    B, S, E = x.shape
    Dh = E // heads
    qkv = x @ params["w_qkv"] + params["b_qkv"][0]
    q, k, v = jnp.split(qkv, 3, axis=-1)
    to_heads = lambda t: t.reshape(B, S, heads, Dh).transpose(0, 2, 1, 3)
    qh, kh, vh = to_heads(q), to_heads(k), to_heads(v)
    s = jnp.einsum("bhqd,bhkd->bhqk", qh, kh)
    if mask:
        tri = jnp.triu(jnp.ones((S, S), bool), 1)
        s = jnp.where(tri, -jnp.inf, s)
    p = jax.nn.softmax(s / math.sqrt(Dh), axis=-1)
    out = jnp.einsum("bhqk,bhkd->bhqd", p, vh)
    out = out.transpose(0, 2, 1, 3).reshape(B, S, E)
    return out @ params["w_dense"] + params["b_dense"][0]


if __name__ == "__main__":
    heads, embed_dim, batch, seq = 4, 32, 2, 8

    key = jax.random.PRNGKey(0)
    kx, kp = jax.random.split(key)
    x = jax.random.normal(kx, (batch, seq, embed_dim), jnp.float32)
    params = init_params(kp, heads, embed_dim)

    y_ref = self_attention_ref(x, params, heads=heads, mask=True)

    # Strict-precision path (f32 MXU operands): matches the torch semantics tightly.
    y32 = jax.block_until_ready(
        self_attention(x, params, heads=heads, mask=True, compute_dtype=jnp.float32)
    )
    assert y32.shape == (batch, seq, embed_dim)
    assert jnp.allclose(y32, y_ref, atol=1e-4, rtol=1e-4), "f32 mismatch vs reference"

    # Performance path (bf16 MXU operands, f32 accumulation / softmax).
    y16 = jax.block_until_ready(
        self_attention(x, params, heads=heads, mask=True, compute_dtype=jnp.bfloat16)
    )
    assert y16.shape == (batch, seq, embed_dim)
    assert jnp.allclose(y16, y_ref, atol=5e-2, rtol=5e-2), "bf16 mismatch vs reference"

    print("KERNEL_OK")
</pallas_src>

<mosaic_0001>
module attributes {stable_mosaic.version = 11 : i64} {
  func.func @_linear_kernel(%arg0: i32, %arg1: i32, %arg2: i32, %arg3: memref<16x32xf32, #tpu.memory_space<vmem>>, %arg4: memref<32x96xf32, #tpu.memory_space<vmem>>, %arg5: memref<1x96xf32, #tpu.memory_space<vmem>>, %arg6: memref<16x96xf32, #tpu.memory_space<vmem>>, %arg7: memref<16x96xf32, #tpu.memory_space<vmem>>) attributes {dimension_semantics = [#tpu.dimension_semantics<parallel>, #tpu.dimension_semantics<parallel>, #tpu.dimension_semantics<arbitrary>], iteration_bounds = array<i64: 1, 1, 1>, scalar_prefetch = 0 : i64, scratch_operands = 1 : i64, tpu.core_type = #tpu.core_type<tc>, window_params = [{transform_indices = @transform_0, window_bounds = array<i64: 16, 32>}, {transform_indices = @transform_1, window_bounds = array<i64: 32, 96>}, {transform_indices = @transform_2, window_bounds = array<i64: 1, 96>}, {transform_indices = @transform_3, window_bounds = array<i64: 16, 96>}]} {
    %c0_i32 = arith.constant 0 : i32
    %0 = arith.cmpi eq, %arg2, %c0_i32 : i32
    %1 = arith.extui %0 : i1 to i32
    %c0_i32_0 = arith.constant 0 : i32
    %2 = arith.cmpi ne, %1, %c0_i32_0 : i32
    scf.if %2 {
      %cst_10 = arith.constant 0.000000e+00 : f32
      %12 = vector.broadcast %cst_10 : f32 to vector<16x96xf32>
      %c0_11 = arith.constant 0 : index
      %c0_12 = arith.constant 0 : index
      %13 = vector.load %arg7[%c0_11, %c0_12] : memref<16x96xf32, #tpu.memory_space<vmem>>, vector<16x96xf32>
      tpu.vector_store %arg7[%c0_11, %c0_12], %12 {strides = array<i32>} : memref<16x96xf32, #tpu.memory_space<vmem>>, vector<16x96xf32>,
    } else {
    }
    %c0 = arith.constant 0 : index
    %c0_1 = arith.constant 0 : index
    %3 = vector.load %arg7[%c0, %c0_1] : memref<16x96xf32, #tpu.memory_space<vmem>>, vector<16x96xf32>
    %c0_2 = arith.constant 0 : index
    %c0_3 = arith.constant 0 : index
    %4 = vector.load %arg3[%c0_2, %c0_3] : memref<16x32xf32, #tpu.memory_space<vmem>>, vector<16x32xf32>
    %c0_4 = arith.constant 0 : index
    %c0_5 = arith.constant 0 : index
    %5 = vector.load %arg4[%c0_4, %c0_5] : memref<32x96xf32, #tpu.memory_space<vmem>>, vector<32x96xf32>
    %cst = arith.constant dense<0.000000e+00> : vector<16x96xf32>
    %6 = tpu.matmul %4, %5, %cst {dimension_numbers = #tpu.dot_dimension_numbers<[1], [0], [0], [1], [0, 0, 1, 1], [], []>} : vector<16x32xf32>, vector<32x96xf32>, vector<16x96xf32> -> vector<16x96xf32>
    %7 = arith.addf %3, %6 : vector<16x96xf32>
    %c0_6 = arith.constant 0 : index
    %c0_7 = arith.constant 0 : index
    %8 = vector.load %arg7[%c0_6, %c0_7] : memref<16x96xf32, #tpu.memory_space<vmem>>, vector<16x96xf32>
    tpu.vector_store %arg7[%c0_6, %c0_7], %7 {strides = array<i32>} : memref<16x96xf32, #tpu.memory_space<vmem>>, vector<16x96xf32>,
    %c0_i32_8 = arith.constant 0 : i32
    %9 = arith.cmpi eq, %arg2, %c0_i32_8 : i32
    %10 = arith.extui %9 : i1 to i32
    %c0_i32_9 = arith.constant 0 : i32
    %11 = arith.cmpi ne, %10, %c0_i32_9 : i32
    scf.if %11 {
      %c0_10 = arith.constant 0 : index
      %c0_11 = arith.constant 0 : index
      %12 = vector.load %arg7[%c0_10, %c0_11] : memref<16x96xf32, #tpu.memory_space<vmem>>, vector<16x96xf32>
      %c0_12 = arith.constant 0 : index
      %c0_13 = arith.constant 0 : index
      %13 = vector.load %arg5[%c0_12, %c0_13] : memref<1x96xf32, #tpu.memory_space<vmem>>, vector<1x96xf32>
      %14 = vector.broadcast %13 : vector<1x96xf32> to vector<16x96xf32>
      %15 = arith.addf %12, %14 : vector<16x96xf32>
      %c0_14 = arith.constant 0 : index
      %c0_15 = arith.constant 0 : index
      %16 = vector.load %arg6[%c0_14, %c0_15] : memref<16x96xf32, #tpu.memory_space<vmem>>, vector<16x96xf32>
      tpu.vector_store %arg6[%c0_14, %c0_15], %15 {strides = array<i32>} : memref<16x96xf32, #tpu.memory_space<vmem>>, vector<16x96xf32>,
    } else {
    }
    return
  }
  func.func @transform_0(%arg0: i32, %arg1: i32, %arg2: i32) -> (i32, i32) {
    %c0_i32 = arith.constant 0 : i32
    return %arg0, %arg2 : i32, i32
  }
  func.func @transform_1(%arg0: i32, %arg1: i32, %arg2: i32) -> (i32, i32) {
    %c0_i32 = arith.constant 0 : i32
    return %arg2, %arg1 : i32, i32
  }
  func.func @transform_2(%arg0: i32, %arg1: i32, %arg2: i32) -> (i32, i32) {
    %c0_i32 = arith.constant 0 : i32
    %c0_i32_0 = arith.constant 0 : i32
    return %c0_i32, %arg1 : i32, i32
  }
  func.func @transform_3(%arg0: i32, %arg1: i32, %arg2: i32) -> (i32, i32) {
    %c0_i32 = arith.constant 0 : i32
    return %arg0, %arg1 : i32, i32
  }
}

</mosaic_0001>

<llo_original>
// kernel: tpu_custom_call.1
$region0: #{tpu_custom_call.1}
  #allocation0 [shape = 'u32[]', space=smem, size = 0x4, offset = 0x4, fixed_abs, tag = 'smem constant byte address 0x4 - core index']
  #allocation1 [shape = 'u32[144,128]{1,0:T(1,128)}', space=vmem, size = 0x12000, scoped, tag = 'internal scratch']
  #allocation2 [shape = 'f32[16,96]{1,0:T(8,128)}', space=vmem, size = 0x2000, scoped, tag = 'scratch operand']
  %s0 = inlined_call_operand.hbm [shape: f32[16,32], index: 0, kind: input, shape index: {}]
  %s1 = inlined_call_operand.hbm [shape: f32[32,96], index: 1, kind: input, shape index: {}]
  %s2 = inlined_call_operand.vmem [shape: f32[1,96], index: 2, kind: input, shape index: {}]
  %s3 = inlined_call_operand.hbm [shape: f32[16,96], index: 3, kind: output, shape index: {}]
  %s4 = sld [smem:[#allocation0]]
  $region38: #{tpu_custom_call.1} parent=0
    _
  %s6 = ssub.s32 1, %s4
  %s7 = scalar_select 0, %s6, %s4
  $region1: #{tpu_custom_call.1} parent=0
    #allocation3 [shape = 'u8[8192]{0}', space=vmem, size = 0x2000, scoped, tag = 'input window, operand 0, single buffered']
    #allocation4 [shape = 's32[1]{0}', space=sflag, size = 0x4, scoped, tag = 'scoped memory for tpu_custom_call.1']
    #allocation5 [shape = 's32[1]{0}', space=sflag, size = 0x4, scoped, tag = 'scoped memory for tpu_custom_call.1']
    #allocation6 [shape = 'u8[16384]{0}', space=vmem, size = 0x4000, scoped, tag = 'input window, operand 1, single buffered']
    #allocation7 [shape = 's32[1]{0}', space=sflag, size = 0x4, scoped, tag = 'scoped memory for tpu_custom_call.1']
    #allocation8 [shape = 'u8[8192]{0}', space=vmem, size = 0x2000, scoped, tag = 'output window, operand 0, single buffered']
    %8 = vsyncpa [#allocation4], 0
    %9 = vsyncpa [#allocation7], 0
    %10 = vsyncpa [#allocation5], 0
    // Predicated region
    $region2: #{tpu_custom_call.1} parent=1 // pred_check
      _
    $region3: #{tpu_custom_call.1} parent=1 // pred_check_branch
      %12 = sbr.rel (0) target = $region5
    $region4: #{tpu_custom_call.1} parent=1 // pred_region
      %s14 = ssub.s32 256, 256
      %15 = vsyncadd [#allocation4], %s14
      %s16 = sshll.u32 [#allocation3], 4
      %s17 = int_to_ptr.vmem [resolvable:$true] %s16
      %22 = dma.hbm_to_vmem [thread:$0]  %s0, 256, %s17, [#allocation4], 128, 128, 8
    $region5: #{tpu_custom_call.1} parent=1 // pred_fallthru
      _
    // Predicated region
    $region6: #{tpu_custom_call.1} parent=1 // pred_check
      _
    $region7: #{tpu_custom_call.1} parent=1 // pred_check_branch
      %24 = sbr.rel (0) target = $region9
    $region8: #{tpu_custom_call.1} parent=1 // pred_region
      %s26 = ssub.s32 512, 512
      %27 = vsyncadd [#allocation7], %s26
      %s28 = sshll.u32 [#allocation6], 4
      %s29 = int_to_ptr.vmem [resolvable:$true] %s28
      %34 = dma.hbm_to_vmem [thread:$0]  %s1, 512, %s29, [#allocation7], 128, 128, 8
    $region9: #{tpu_custom_call.1} parent=1 // pred_fallthru
      _
    // Predicated region
    $region10: #{tpu_custom_call.1} parent=1 // pred_check
      _
    $region11: #{tpu_custom_call.1} parent=1 // pred_check_branch
      %36 = sbr.rel (0) target = $region13
    $region12: #{tpu_custom_call.1} parent=1 // pred_region
      _
    $region13: #{tpu_custom_call.1} parent=1 // pred_fallthru
      _
    // Predicated region
    $region14: #{tpu_custom_call.1} parent=1 // pred_check
      _
    $region15: #{tpu_custom_call.1} parent=1 // pred_check_branch
      %38 = sbr.rel (0) target = $region17
    $region16: #{tpu_custom_call.1} parent=1 // pred_region
      %39 = dma.done [#allocation4], 256
    $region17: #{tpu_custom_call.1} parent=1 // pred_fallthru
      _
    // Predicated region
    $region18: #{tpu_custom_call.1} parent=1 // pred_check
      _
    $region19: #{tpu_custom_call.1} parent=1 // pred_check_branch
      %41 = sbr.rel (0) target = $region21
    $region20: #{tpu_custom_call.1} parent=1 // pred_region
      %42 = dma.done [#allocation7], 512
    $region21: #{tpu_custom_call.1} parent=1 // pred_fallthru
      _
    %p43 = scmp.eq.s32.totalorder 0, 0
    // Predicated region
    $region22: #{tpu_custom_call.1} parent=1 // pred_check
      %p44 = pneg %p43
    $region23: #{tpu_custom_call.1} parent=1 // pred_check_branch
      %46 = sbr.rel (%p44) target = $region25
    $region24: #{tpu_custom_call.1} parent=1 // pred_region
      %vm47 = vcmask 785408
      %48 = vst.msk [vmem:[#allocation2] sm:$0xff] %vm47, 0.0
      %49 = vst.msk [vmem:[#allocation2 + $0x8] sm:$0xff] %vm47, 0.0
    $region25: #{tpu_custom_call.1} parent=1 // pred_fallthru
      _
    %v50 = vld [vmem:[#allocation2] sm:$0xff]
    %v51 = vld [vmem:[#allocation2 + $0x8] sm:$0xff]
    %v52 = vld [vmem:[#allocation3] sm:$0xff]
    %v53 = vld [vmem:[#allocation3 + $0x8] sm:$0xff]
    %v54 = vld [vmem:[#allocation6] sm:$0xff]
    %v55 = vld [vmem:[#allocation6 + $0x8] sm:$0xff]
    %v56 = vld [vmem:[#allocation6 + $0x10] sm:$0xff]
    %v57 = vld [vmem:[#allocation6 + $0x18] sm:$0xff]
    %vm58 = vcmask 261120
    %v60 = vsel %vm58, %v52, 0
    %v63 = vsel %vm58, %v53, 0
    %65 = vmatprep.subr.mxu0 0.0
    %66 = vmatpush1.msra.mxu0 %v54
    %67 = vmatprep.subr.mxu0 0.0
    %68 = vmatpush1.msra.mxu0 %v55
    %69 = vmatprep.subr.mxu0 0.0
    %70 = vmatpush1.msra.mxu0 %v56
    %71 = vmatprep.subr.mxu0 0.0
    %72 = vmatpush1.msra.mxu0 %v57
    %73 = vmatprep.subr.mxu0 0.0
    %74 = vmatpush1.msra.mxu0 0.0
    %75 = vmatprep.subr.mxu0 0.0
    %76 = vmatpush1.msra.mxu0 0.0
    %77 = vmatprep.subr.mxu0 0.0
    %78 = vmatpush1.msra.mxu0 0.0
    %79 = vmatprep.subr.mxu0 0.0
    %80 = vmatpush1.msra.mxu0 0.0
    %81 = vmatprep.subr.mxu0 0.0
    %82 = vmatpush1.msra.mxu0 0.0
    %83 = vmatprep.subr.mxu0 0.0
    %84 = vmatpush1.msra.mxu0 0.0
    %85 = vmatprep.subr.mxu0 0.0
    %86 = vmatpush1.msra.mxu0 0.0
    %87 = vmatprep.subr.mxu0 0.0
    %88 = vmatpush1.msra.mxu0 0.0
    %89 = vmatprep.subr.mxu0 0.0
    %90 = vmatpush1.msra.mxu0 0.0
    %91 = vmatprep.subr.mxu0 0.0
    %92 = vmatpush1.msra.mxu0 0.0
    %93 = vmatprep.subr.mxu0 0.0
    %94 = vmatpush1.msra.mxu0 0.0
    %95 = vmatprep.subr.mxu0 0.0
    %96 = vmatpush1.msra.mxu0 0.0
    %97 = vmatprep.subr.mxu0 0.0
    %98 = vmatpush1.msra.mxu0 0.0
    %99 = vmatprep.subr.mxu0 0.0
    %100 = vmatpush1.msra.mxu0 0.0
    %101 = vmatprep.subr.mxu0 0.0
    %102 = vmatpush1.msra.mxu0 0.0
    %103 = vmatprep.subr.mxu0 0.0
    %104 = vmatpush1.msra.mxu0 0.0
    %105 = vmatprep.subr.mxu0 0.0
    %106 = vmatpush1.msra.mxu0 0.0
    %107 = vmatprep.subr.mxu0 0.0
    %108 = vmatpush1.msra.mxu0 0.0
    %109 = vmatprep.subr.mxu0 0.0
    %110 = vmatpush1.msra.mxu0 0.0
    %111 = vmatprep.subr.mxu0 0.0
    %112 = vmatpush1.msra.mxu0 0.0
    %113 = vmatprep.subr.mxu0 0.0
    %114 = vmatpush1.msra.mxu0 0.0
    %115 = vmatprep.subr.mxu0 0.0
    %116 = vmatpush1.msra.mxu0 0.0
    %117 = vmatprep.subr.mxu0 0.0
    %118 = vmatpush1.msra.mxu0 0.0
    %119 = vmatprep.subr.mxu0 0.0
    %120 = vmatpush1.msra.mxu0 0.0
    %121 = vmatprep.subr.mxu0 0.0
    %122 = vmatpush1.msra.mxu0 0.0
    %123 = vmatprep.subr.mxu0 0.0
    %124 = vmatpush1.msra.mxu0 0.0
    %125 = vmatprep.subr.mxu0 0.0
    %126 = vmatpush1.msra.mxu0 0.0
    %127 = vmatprep.subr.mxu0 0.0
    %128 = vmatpush1.msra.mxu0 0.0
    %129 = vmatprep.mubr.f32.mxu0 0.0
    %130 = vmatmul.mubr.f32.gmra.mrb[0].mxu0 %v60
    %v131 = vpop.f32.mrb[0].mxu0
    %v132 = vadd.f32 0.0, %v131
    %v133 = vpop.f32.mrb[0].mxu0
    %134 = vmatprep.mubr.f32.mxu0 0.0
    %135 = vmatmul.mubr.f32.gmra.mrb[0].mxu0 %v63
    %v136 = vpop.f32.mrb[0].mxu0
    %v137 = vadd.f32 0.0, %v136
    %v138 = vpop.f32.mrb[0].mxu0
    %139 = vdwg.mxu0
    %v140 = vadd.f32 %v50, %v132
    %v141 = vadd.f32 %v51, %v137
    %vm142 = vcmask 785408
    %143 = vst.msk [vmem:[#allocation2] sm:$0xff] %vm142, %v140
    %144 = vst.msk [vmem:[#allocation2 + $0x8] sm:$0xff] %vm142, %v141
    // Predicated region
    $region26: #{tpu_custom_call.1} parent=1 // pred_check
      %p145 = pneg %p43
    $region27: #{tpu_custom_call.1} parent=1 // pred_check_branch
      %147 = sbr.rel (%p145) target = $region29
    $region28: #{tpu_custom_call.1} parent=1 // pred_region
      %v148 = vld [vmem:[#allocation2] sm:$0xff]
      %v149 = vld [vmem:[#allocation2 + $0x8] sm:$0xff]
      %v150 = vld [vmem:[%s2] sm:$0x1]
      %v152 = vlaneseq
      %v153 = vshrl.u32 %v152, 7
      %v154 = vsub.s32 0, %v153
      %v155 = vrot.slane %v150, %v154
      %v157 = vadd.f32 %v148, %v155
      %v158 = vadd.f32 %v149, %v155
      %159 = vst.msk [vmem:[#allocation8] sm:$0xff] %vm142, %v157
      %160 = vst.msk [vmem:[#allocation8 + $0x8] sm:$0xff] %vm142, %v158
    $region29: #{tpu_custom_call.1} parent=1 // pred_fallthru
      _
    // Predicated region
    $region30: #{tpu_custom_call.1} parent=1 // pred_check
      _
    $region31: #{tpu_custom_call.1} parent=1 // pred_check_branch
      %162 = sbr.rel (0) target = $region33
    $region32: #{tpu_custom_call.1} parent=1 // pred_region
      %s164 = ssub.s32 256, 256
      %165 = vsyncadd [#allocation5], %s164
      %s166 = sshll.u32 [#allocation8], 4
      %s167 = int_to_ptr.vmem [resolvable:$true] %s166
      %172 = dma.vmem_to_hbm [thread:$0]  %s167, 256, %s3, [#allocation5], 128, 128, 8
    $region33: #{tpu_custom_call.1} parent=1 // pred_fallthru
      _
    // Predicated region
    $region34: #{tpu_custom_call.1} parent=1 // pred_check
      _
    $region35: #{tpu_custom_call.1} parent=1 // pred_check_branch
      %174 = sbr.rel (0) target = $region37
    $region36: #{tpu_custom_call.1} parent=1 // pred_region
      %175 = dma.done [#allocation5], 256
    $region37: #{tpu_custom_call.1} parent=1 // pred_fallthru
      _
    %176 = vsyncpa [#allocation4], 1
    %177 = vsyncpa [#allocation7], 1
    %178 = vsyncpa [#allocation5], 1

</llo_original>
